<compile_context>
chip_gen: v6e
topology: v6e:2x2x1
jax: 0.10.0
libtpu: 0.0.40
codegen_flags: <defaults>
</compile_context>

<pallas_src>
import functools

import jax
import jax.numpy as jnp
from jax.experimental import pallas as pl
from jax.experimental.pallas import tpu as pltpu


def _cdiv(a, b):
    return -(-a // b)


def _round_up(a, m):
    return _cdiv(a, m) * m


def _silu(x, approx):
    if approx:
        # exp and approx-reciprocal both ride the EUP slot; VALU stays free.
        return x * pl.reciprocal(1.0 + jnp.exp(-x), approx=True)
    return x * jax.nn.sigmoid(x)


def csp_ffc_kernel(x_ref, w12_ref, b12_ref, w3_ref, b3_ref, o_ref, *, approx):
    """Fused CSPFFCLayer tile (pixels-in-lane layout).

    x_ref  : (Cin,  Tpix)  input tile, native dtype (cast in-kernel)
    w12_ref: (2*Ch, Cin)   folded [conv1 ; conv2] weights (output-major)
    b12_ref: (2*Ch, 1)     folded biases (f32)
    w3_ref : (Cout, 2*Ch)  folded conv3 weights
    b3_ref : (Cout, 1)     folded conv3 bias (f32)
    o_ref  : (Cout, Tpix)  output tile (lane-dense stores)
    """
    # Read x once in native dtype; cast on the VPU to the compute dtype.
    x = x_ref[...].astype(w12_ref.dtype)
    # conv1 + conv2 in one MXU call. Rows [0, Ch) are the conv1 branch
    # (self.m == identity), rows [Ch, 2*Ch) the conv2 branch -> already in
    # torch.cat((x_1, x_2), dim=1) order, so no in-kernel concatenate.
    h12 = jnp.dot(w12_ref[...], x, preferred_element_type=jnp.float32)
    a12 = _silu(h12 + b12_ref[...], approx)                # f32 bias + SiLU
    h3 = jnp.dot(w3_ref[...], a12.astype(w3_ref.dtype),
                 preferred_element_type=jnp.float32)
    o_ref[...] = _silu(h3 + b3_ref[...], approx).astype(o_ref.dtype)


def _vmem_budget_bytes():
    """Per-generation VMEM budget with headroom for Mosaic scratch."""
    try:
        info = pltpu.get_tpu_info()
        cap = int(getattr(info, "vmem_capacity_bytes", 64 * 2**20))
    except Exception:  # non-TPU / interpret fallback
        cap = 64 * 2**20
    # ~45 MiB max (v7x physical VMEM is 64 MiB per TC; v5e/v6e have 128 MiB).
    return min(48 * 2**20, int(0.70 * cap))


@functools.partial(jax.jit,
                   static_argnames=("tm_pix", "compute_dtype", "out_dtype"))
def csp_ffc_forward(x_nchw, w12, b12, w3, b3, *, tm_pix=None,
                    compute_dtype=jnp.bfloat16, out_dtype=None):
    if out_dtype is None:
        out_dtype = compute_dtype
    N, Cin, H, W = x_nchw.shape
    Ch2 = w12.shape[0]            # 2 * hidden_channels
    Cout = w3.shape[0]
    HW = H * W

    # NCHW -> (N, Cin, H*W): pure reshape of contiguous memory (no transpose,
    # no dtype cast). Pixels land on the lane axis.
    x3 = x_nchw.reshape(N, Cin, HW)

    x_itemsize = x_nchw.dtype.itemsize
    out_itemsize = jnp.dtype(out_dtype).itemsize
    c_itemsize = jnp.dtype(compute_dtype).itemsize

    vmem_limit = _vmem_budget_bytes()
    weight_bytes = ((Ch2 * Cin + Cout * Ch2) * c_itemsize
                    + (Ch2 + Cout) * 4)                    # resident constants
    per_pix_bytes = 2 * (Cin * x_itemsize + Cout * out_itemsize)  # 2x dbl-buf

    if tm_pix is not None:
        tpix = tm_pix
    else:
        tile_budget = max(vmem_limit - weight_bytes - (2 << 20),
                          128 * per_pix_bytes)
        tpix = max(128, min(8192, (tile_budget // per_pix_bytes) // 128 * 128))
        # Don't make the tile wider than the (128-rounded) pixel extent.
        tpix = min(tpix, _round_up(HW, 128))
        if tpix >= HW:
            tpix = HW          # single full-extent block (always legal)
        # v7x megacore balance: make sure there are >= 2 grid steps to shard
        # across the 2 TensorCores when possible.
        if N * _cdiv(HW, tpix) < 2 and HW > 128:
            tpix = max(128, _round_up(_cdiv(HW, 2), 128))

    num_pix_tiles = _cdiv(HW, tpix)

    w12c = w12.astype(compute_dtype)
    w3c = w3.astype(compute_dtype)
    b12f = b12.astype(jnp.float32)
    b3f = b3.astype(jnp.float32)

    # Exact sigmoid on the f32 validation path; EUP approx on the perf path.
    approx_silu = jnp.dtype(compute_dtype) == jnp.dtype(jnp.bfloat16)
    kernel = functools.partial(csp_ffc_kernel, approx=approx_silu)

    out3 = pl.pallas_call(
        kernel,
        out_shape=jax.ShapeDtypeStruct((N, Cout, HW), out_dtype),
        grid_spec=pltpu.PrefetchScalarGridSpec(
            num_scalar_prefetch=0,
            grid=(N, num_pix_tiles),
            in_specs=[
                # x tile: batch dim squeezed, (Cin, tpix) in the kernel; the
                # final block may be partial (masked) when tpix does not
                # divide H*W — safe, all pixel-axis ops are elementwise.
                pl.BlockSpec((None, Cin, tpix), lambda n, j: (n, 0, j)),
                # Constant-index weight/bias blocks: block index never
                # changes across the grid -> DMA'd once, stay resident.
                pl.BlockSpec((Ch2, Cin), lambda n, j: (0, 0)),   # W12
                pl.BlockSpec((Ch2, 1), lambda n, j: (0, 0)),     # b12
                pl.BlockSpec((Cout, Ch2), lambda n, j: (0, 0)),  # W3
                pl.BlockSpec((Cout, 1), lambda n, j: (0, 0)),    # b3
            ],
            out_specs=pl.BlockSpec((None, Cout, tpix),
                                   lambda n, j: (n, 0, j)),
        ),
        compiler_params=pltpu.CompilerParams(
            dimension_semantics=("parallel", "parallel"),
            vmem_limit_bytes=vmem_limit),
    )(x3, w12c, b12f, w3c, b3f)

    # (N, Cout, H*W) -> NCHW: free reshape, no transpose, no slice.
    return out3.reshape(N, Cout, H, W)


def fold_bn(w_oi, gamma, beta, mean, var, eps=1e-3):
    """Fold eval-mode BatchNorm2d into a 1x1 conv.

    w_oi: (Cout, Cin) conv weight (spatial dims squeezed).
    Returns (w (Cout, Cin), bias (Cout,)) kept output-major for left-multiply.
    """
    scale = gamma / jnp.sqrt(var + eps)
    return w_oi * scale[:, None], beta - mean * scale


def make_params(key, in_channels, out_channels, expansion=0.5):
    """Deterministic synthetic params matching CSPFFCLayer.__init__ shapes."""
    hidden = int(out_channels * expansion)

    def conv_bn(k, cin, cout):
        kw, kg, kb, km, kv = jax.random.split(k, 5)
        w = jax.random.normal(kw, (cout, cin), jnp.float32) * 0.1   # 1x1 conv
        gamma = 1.0 + 0.1 * jax.random.normal(kg, (cout,), jnp.float32)
        beta = 0.1 * jax.random.normal(kb, (cout,), jnp.float32)
        mean = 0.1 * jax.random.normal(km, (cout,), jnp.float32)
        var = jnp.abs(jax.random.normal(kv, (cout,), jnp.float32)) + 0.5
        return fold_bn(w, gamma, beta, mean, var)

    k1, k2, k3 = jax.random.split(key, 3)
    w1, b1 = conv_bn(k1, in_channels, hidden)
    w2, b2 = conv_bn(k2, in_channels, hidden)
    w3, b3 = conv_bn(k3, 2 * hidden, out_channels)
    # Fuse conv1/conv2 along output channels, matching torch.cat order.
    w12 = jnp.concatenate([w1, w2], axis=0)               # (2*hidden, Cin)
    b12 = jnp.concatenate([b1, b2], axis=0)[:, None]      # (2*hidden, 1)
    return w12, b12, w3, b3[:, None]


def reference_forward(x_nchw, w12, b12, w3, b3, compute_dtype=jnp.float32,
                      out_dtype=None):
    """Pure-JAX reference with the same folded-BN / dtype-cast math."""
    if out_dtype is None:
        out_dtype = compute_dtype
    N, Cin, H, W = x_nchw.shape
    xf = x_nchw.reshape(N, Cin, H * W).astype(compute_dtype)
    h12 = jnp.einsum("oc,nct->not", w12.astype(compute_dtype), xf,
                     preferred_element_type=jnp.float32) + b12
    a12 = (h12 * jax.nn.sigmoid(h12)).astype(compute_dtype)
    h3 = jnp.einsum("oc,nct->not", w3.astype(compute_dtype), a12,
                    preferred_element_type=jnp.float32) + b3
    out = h3 * jax.nn.sigmoid(h3)
    return out.reshape(N, -1, H, W).astype(out_dtype)


if __name__ == "__main__":
    key = jax.random.PRNGKey(0)
    kx, kp = jax.random.split(key)

    N, Cin, Hs, Ws = 2, 4, 16, 16
    Cout = 8   # hidden = 4, concat width = 8

    x = jax.random.normal(kx, (N, Cin, Hs, Ws), jnp.float32)
    params = make_params(kp, Cin, Cout)

    # f32 compute path (exact sigmoid): tight check against the reference.
    out_f32 = jax.block_until_ready(
        csp_ffc_forward(x, *params, compute_dtype=jnp.float32))
    ref_f32 = reference_forward(x, *params, compute_dtype=jnp.float32)
    assert out_f32.shape == (N, Cout, Hs, Ws)
    assert out_f32.dtype == jnp.float32
    assert jnp.allclose(out_f32, ref_f32, atol=1e-3, rtol=1e-3), (
        float(jnp.max(jnp.abs(out_f32 - ref_f32))))

    # Default perf path: bf16 compute, bf16 output (halved HBM writeback),
    # in-kernel x cast, EUP approx-reciprocal SiLU. Checked against the
    # identically-cast reference.
    out_bf16 = jax.block_until_ready(csp_ffc_forward(x, *params))
    ref_bf16 = reference_forward(x, *params, compute_dtype=jnp.bfloat16)
    assert out_bf16.shape == (N, Cout, Hs, Ws)
    assert out_bf16.dtype == jnp.bfloat16
    assert jnp.allclose(out_bf16.astype(jnp.float32),
                        ref_bf16.astype(jnp.float32),
                        atol=2e-2, rtol=2e-2), (
        float(jnp.max(jnp.abs(out_bf16.astype(jnp.float32)
                              - ref_bf16.astype(jnp.float32)))))

    print("KERNEL_OK")
</pallas_src>

<mosaic_0001>
module attributes {stable_mosaic.version = 11 : i64} {
  func.func @csp_ffc_kernel(%arg0: i32, %arg1: i32, %arg2: memref<1x4x256xf32, #tpu.memory_space<vmem>>, %arg3: memref<8x4xf32, #tpu.memory_space<vmem>>, %arg4: memref<8x1xf32, #tpu.memory_space<vmem>>, %arg5: memref<8x8xf32, #tpu.memory_space<vmem>>, %arg6: memref<8x1xf32, #tpu.memory_space<vmem>>, %arg7: memref<1x8x256xf32, #tpu.memory_space<vmem>>) attributes {dimension_semantics = [#tpu.dimension_semantics<parallel>, #tpu.dimension_semantics<parallel>], iteration_bounds = array<i64: 2, 1>, scalar_prefetch = 0 : i64, scratch_operands = 0 : i64, tpu.core_type = #tpu.core_type<tc>, window_params = [{transform_indices = @transform_0, window_bounds = array<i64: 1, 4, 256>}, {pipeline_mode = #tpu.pipeline_mode<synchronous>, transform_indices = @transform_1, window_bounds = array<i64: 8, 4>}, {pipeline_mode = #tpu.pipeline_mode<synchronous>, transform_indices = @transform_2, window_bounds = array<i64: 8, 1>}, {pipeline_mode = #tpu.pipeline_mode<synchronous>, transform_indices = @transform_3, window_bounds = array<i64: 8, 8>}, {pipeline_mode = #tpu.pipeline_mode<synchronous>, transform_indices = @transform_4, window_bounds = array<i64: 8, 1>}, {transform_indices = @transform_5, window_bounds = array<i64: 1, 8, 256>}]} {
    %c0 = arith.constant 0 : index
    %c0_0 = arith.constant 0 : index
    %c0_1 = arith.constant 0 : index
    %0 = vector.load %arg2[%c0, %c0_0, %c0_1] : memref<1x4x256xf32, #tpu.memory_space<vmem>>, vector<1x4x256xf32>
    %1 = vector.shape_cast %0 : vector<1x4x256xf32> to vector<4x256xf32>
    %c0_2 = arith.constant 0 : index
    %c0_3 = arith.constant 0 : index
    %2 = vector.load %arg3[%c0_2, %c0_3] : memref<8x4xf32, #tpu.memory_space<vmem>>, vector<8x4xf32>
    %cst = arith.constant dense<0.000000e+00> : vector<8x256xf32>
    %3 = tpu.matmul %2, %1, %cst {dimension_numbers = #tpu.dot_dimension_numbers<[1], [0], [0], [1], [0, 0, 1, 1], [], []>} : vector<8x4xf32>, vector<4x256xf32>, vector<8x256xf32> -> vector<8x256xf32>
    %c0_4 = arith.constant 0 : index
    %c0_5 = arith.constant 0 : index
    %4 = vector.load %arg4[%c0_4, %c0_5] : memref<8x1xf32, #tpu.memory_space<vmem>>, vector<8x1xf32>
    %5 = vector.broadcast %4 : vector<8x1xf32> to vector<8x256xf32>
    %6 = arith.addf %3, %5 : vector<8x256xf32>
    %7 = arith.negf %6 : vector<8x256xf32>
    %8 = math.exp %7 : vector<8x256xf32>
    %cst_6 = arith.constant 1.000000e+00 : f32
    %9 = vector.broadcast %cst_6 : f32 to vector<8x256xf32>
    %10 = arith.addf %9, %8 : vector<8x256xf32>
    %11 = arith.divf %9, %10 : vector<8x256xf32>
    %12 = arith.mulf %6, %11 : vector<8x256xf32>
    %c0_7 = arith.constant 0 : index
    %c0_8 = arith.constant 0 : index
    %13 = vector.load %arg5[%c0_7, %c0_8] : memref<8x8xf32, #tpu.memory_space<vmem>>, vector<8x8xf32>
    %cst_9 = arith.constant dense<0.000000e+00> : vector<8x256xf32>
    %14 = tpu.matmul %13, %12, %cst_9 {dimension_numbers = #tpu.dot_dimension_numbers<[1], [0], [0], [1], [0, 0, 1, 1], [], []>} : vector<8x8xf32>, vector<8x256xf32>, vector<8x256xf32> -> vector<8x256xf32>
    %c0_10 = arith.constant 0 : index
    %c0_11 = arith.constant 0 : index
    %15 = vector.load %arg6[%c0_10, %c0_11] : memref<8x1xf32, #tpu.memory_space<vmem>>, vector<8x1xf32>
    %16 = vector.broadcast %15 : vector<8x1xf32> to vector<8x256xf32>
    %17 = arith.addf %14, %16 : vector<8x256xf32>
    %18 = arith.negf %17 : vector<8x256xf32>
    %19 = math.exp %18 : vector<8x256xf32>
    %cst_12 = arith.constant 1.000000e+00 : f32
    %20 = vector.broadcast %cst_12 : f32 to vector<8x256xf32>
    %21 = arith.addf %20, %19 : vector<8x256xf32>
    %22 = arith.divf %20, %21 : vector<8x256xf32>
    %23 = arith.mulf %17, %22 : vector<8x256xf32>
    %c0_13 = arith.constant 0 : index
    %c0_14 = arith.constant 0 : index
    %c0_15 = arith.constant 0 : index
    %24 = vector.load %arg7[%c0_13, %c0_14, %c0_15] : memref<1x8x256xf32, #tpu.memory_space<vmem>>, vector<1x8x256xf32>
    %25 = vector.shape_cast %24 : vector<1x8x256xf32> to vector<8x256xf32>
    %26 = vector.shape_cast %23 : vector<8x256xf32> to vector<1x8x256xf32>
    tpu.vector_store %arg7[%c0_13, %c0_14, %c0_15], %26 {strides = array<i32>} : memref<1x8x256xf32, #tpu.memory_space<vmem>>, vector<1x8x256xf32>,
    return
  }
  func.func @transform_0(%arg0: i32, %arg1: i32) -> (i32, i32, i32) {
    %c0_i32 = arith.constant 0 : i32
    %c0_i32_0 = arith.constant 0 : i32
    return %arg0, %c0_i32, %arg1 : i32, i32, i32
  }
  func.func @transform_1(%arg0: i32, %arg1: i32) -> (i32, i32) {
    %c0_i32 = arith.constant 0 : i32
    %c0_i32_0 = arith.constant 0 : i32
    %c0_i32_1 = arith.constant 0 : i32
    return %c0_i32, %c0_i32_0 : i32, i32
  }
  func.func @transform_2(%arg0: i32, %arg1: i32) -> (i32, i32) {
    %c0_i32 = arith.constant 0 : i32
    %c0_i32_0 = arith.constant 0 : i32
    %c0_i32_1 = arith.constant 0 : i32
    return %c0_i32, %c0_i32_0 : i32, i32
  }
  func.func @transform_3(%arg0: i32, %arg1: i32) -> (i32, i32) {
    %c0_i32 = arith.constant 0 : i32
    %c0_i32_0 = arith.constant 0 : i32
    %c0_i32_1 = arith.constant 0 : i32
    return %c0_i32, %c0_i32_0 : i32, i32
  }
  func.func @transform_4(%arg0: i32, %arg1: i32) -> (i32, i32) {
    %c0_i32 = arith.constant 0 : i32
    %c0_i32_0 = arith.constant 0 : i32
    %c0_i32_1 = arith.constant 0 : i32
    return %c0_i32, %c0_i32_0 : i32, i32
  }
  func.func @transform_5(%arg0: i32, %arg1: i32) -> (i32, i32, i32) {
    %c0_i32 = arith.constant 0 : i32
    %c0_i32_0 = arith.constant 0 : i32
    return %arg0, %c0_i32, %arg1 : i32, i32, i32
  }
}

</mosaic_0001>

<llo_original>
// kernel: csp_ffc_forward.1
$region0: #{csp_ffc_forward.1}
  #allocation0 [shape = 'u32[]', space=smem, size = 0x4, offset = 0x4, fixed_abs, tag = 'smem constant byte address 0x4 - core index']
  #allocation1 [shape = 'u32[144,128]{1,0:T(1,128)}', space=vmem, size = 0x12000, scoped, tag = 'internal scratch']
  %s0 = inlined_call_operand.vmem [shape: f32[2,4,256], index: 0, kind: input, shape index: {}]
  %s1 = inlined_call_operand.vmem [shape: f32[8,4], index: 1, kind: input, shape index: {}]
  %s2 = inlined_call_operand.vmem [shape: f32[8,1], index: 2, kind: input, shape index: {}]
  %s3 = inlined_call_operand.vmem [shape: f32[8,8], index: 3, kind: input, shape index: {}]
  %s4 = inlined_call_operand.vmem [shape: f32[8,1], index: 4, kind: input, shape index: {}]
  %s5 = inlined_call_operand.vmem [shape: f32[2,8,256], index: 5, kind: output, shape index: {}]
  %s6 = sld [smem:[#allocation0]]
  $region53: #{csp_ffc_forward.1} parent=0
    _
  %s8 = ssub.s32 1, %s6
  %s9 = scalar_select 0, %s8, %s6
  loop: start=0, step=1, limit=4
  $region2: #{csp_ffc_forward.1} parent=0 // loop_pre_header
    _
  $region3: #{csp_ffc_forward.1} parent=0 // loop_header
    %s11 = sphi 0, %s15
    %p12 = scmp.ge.s32.totalorder %s11, 4
    %s18 = sphi 0, %s30
    %s19 = sphi 0, %s26
    %s20 = sphi 0, %s18
    %s21 = sphi 0, %s19
    %s22 = sphi 0, %s20
    %s23 = sphi 0, %s21
    %s35 = sphi 0, %s37
    %s38 = sphi 0, %s35
    %s39 = sphi 0, %s38
    %s55 = sphi 0, %s39
    %s59 = sphi 0, %s59
    %s61 = sphi 0, %s59
    %s62 = sphi 0, %s61
    %s76 = sphi 0, %s62
    %s80 = sphi 0, %s80
    %s82 = sphi 0, %s80
    %s83 = sphi 0, %s82
    %s97 = sphi 0, %s83
    %s101 = sphi 0, %s101
    %s103 = sphi 0, %s101
    %s104 = sphi 0, %s103
    %s118 = sphi 0, %s104
    %s122 = sphi 0, %s122
    %s124 = sphi 0, %s122
    %s125 = sphi 0, %s124
    %s139 = sphi 0, %s125
    %s147 = sphi 0, %s149
    %s150 = sphi 0, %s147
    %s151 = sphi 0, %s150
    %s167 = sphi 0, %s151
  $region4: #{csp_ffc_forward.1} parent=0 // loop_header_branch
    %14 = sbr.rel (%p12) target = $region8
  $region5: #{csp_ffc_forward.1} parent=0 // loop_body
    %s16 = ssub.s32 %s11, 1
    %s17 = ssub.s32 %s11, 2
    %s24 = sadd.s32 1, %s19
    %p25 = scmp.ge.s32.totalorder %s24, 1
    %s26 = scalar_select %p25, 0, %s24
    %s27 = sadd.s32 1, %s18
    %s28 = scalar_select %p25, %s27, %s18
    %p29 = scmp.ge.s32.totalorder %s28, 2
    %s30 = scalar_select %p29, 0, %s28
    %s31 = ssub.s32 %s18, %s30
    %s32 = ssub.s32 %s19, %s26
    %s33 = sor.u32 %s31, %s32
    %p34 = scmp.eq.s32.totalorder %s33, 0
    %s36 = sadd.s32 %s35, 1
    %s37 = scalar_select %p34, %s35, %s36
    %p40 = pneg %p34
    %p41 = scmp.eq.s32.totalorder %s11, 1
    %p42 = por %p40, %p41
    %p43 = scmp.ne.s32.totalorder %s35, %s38
    %p44 = scmp.eq.s32.totalorder %s11, 0
    %p45 = por %p43, %p44
    %p46 = scmp.ne.s32.totalorder %s35, %s38
    %p47 = scmp.eq.s32.totalorder %s16, 1
    %p48 = por %p46, %p47
    %p49 = scmp.ne.s32.totalorder %s38, %s39
    %p50 = scmp.eq.s32.totalorder %s16, 0
    %p51 = por %p49, %p50
    %p52 = scmp.ne.s32.totalorder %s38, %s39
    %p53 = scmp.eq.s32.totalorder %s17, 1
    %p54 = por %p52, %p53
    %p56 = scmp.ne.s32.totalorder %s39, %s55
    %p57 = scmp.eq.s32.totalorder %s17, 0
    %p58 = por %p56, %p57
    %s60 = sadd.s32 %s59, 1
    %p63 = scmp.eq.s32.totalorder %s11, 1
    %p64 = scmp.ne.s32.totalorder %s59, %s61
    %p65 = scmp.eq.s32.totalorder %s11, 0
    %p66 = por %p64, %p65
    %p67 = scmp.ne.s32.totalorder %s59, %s61
    %p68 = scmp.eq.s32.totalorder %s16, 1
    %p69 = por %p67, %p68
    %p70 = scmp.ne.s32.totalorder %s61, %s62
    %p71 = scmp.eq.s32.totalorder %s16, 0
    %p72 = por %p70, %p71
    %p73 = scmp.ne.s32.totalorder %s61, %s62
    %p74 = scmp.eq.s32.totalorder %s17, 1
    %p75 = por %p73, %p74
    %p77 = scmp.ne.s32.totalorder %s62, %s76
    %p78 = scmp.eq.s32.totalorder %s17, 0
    %p79 = por %p77, %p78
    %s81 = sadd.s32 %s80, 1
    %p84 = scmp.eq.s32.totalorder %s11, 1
    %p85 = scmp.ne.s32.totalorder %s80, %s82
    %p86 = scmp.eq.s32.totalorder %s11, 0
    %p87 = por %p85, %p86
    %p88 = scmp.ne.s32.totalorder %s80, %s82
    %p89 = scmp.eq.s32.totalorder %s16, 1
    %p90 = por %p88, %p89
    %p91 = scmp.ne.s32.totalorder %s82, %s83
    %p92 = scmp.eq.s32.totalorder %s16, 0
    %p93 = por %p91, %p92
    %p94 = scmp.ne.s32.totalorder %s82, %s83
    %p95 = scmp.eq.s32.totalorder %s17, 1
    %p96 = por %p94, %p95
    %p98 = scmp.ne.s32.totalorder %s83, %s97
    %p99 = scmp.eq.s32.totalorder %s17, 0
    %p100 = por %p98, %p99
    %s102 = sadd.s32 %s101, 1
    %p105 = scmp.eq.s32.totalorder %s11, 1
    %p106 = scmp.ne.s32.totalorder %s101, %s103
    %p107 = scmp.eq.s32.totalorder %s11, 0
    %p108 = por %p106, %p107
    %p109 = scmp.ne.s32.totalorder %s101, %s103
    %p110 = scmp.eq.s32.totalorder %s16, 1
    %p111 = por %p109, %p110
    %p112 = scmp.ne.s32.totalorder %s103, %s104
    %p113 = scmp.eq.s32.totalorder %s16, 0
    %p114 = por %p112, %p113
    %p115 = scmp.ne.s32.totalorder %s103, %s104
    %p116 = scmp.eq.s32.totalorder %s17, 1
    %p117 = por %p115, %p116
    %p119 = scmp.ne.s32.totalorder %s104, %s118
    %p120 = scmp.eq.s32.totalorder %s17, 0
    %p121 = por %p119, %p120
    %s123 = sadd.s32 %s122, 1
    %p126 = scmp.eq.s32.totalorder %s11, 1
    %p127 = scmp.ne.s32.totalorder %s122, %s124
    %p128 = scmp.eq.s32.totalorder %s11, 0
    %p129 = por %p127, %p128
    %p130 = scmp.ne.s32.totalorder %s122, %s124
    %p131 = scmp.eq.s32.totalorder %s16, 1
    %p132 = por %p130, %p131
    %p133 = scmp.ne.s32.totalorder %s124, %s125
    %p134 = scmp.eq.s32.totalorder %s16, 0
    %p135 = por %p133, %p134
    %p136 = scmp.ne.s32.totalorder %s124, %s125
    %p137 = scmp.eq.s32.totalorder %s17, 1
    %p138 = por %p136, %p137
    %p140 = scmp.ne.s32.totalorder %s125, %s139
    %p141 = scmp.eq.s32.totalorder %s17, 0
    %p142 = por %p140, %p141
    %s143 = ssub.s32 %s18, %s30
    %s144 = ssub.s32 %s19, %s26
    %s145 = sor.u32 %s143, %s144
    %p146 = scmp.eq.s32.totalorder %s145, 0
    %s148 = sadd.s32 %s147, 1
    %s149 = scalar_select %p146, %s147, %s148
    %p152 = pneg %p146
    %p153 = scmp.eq.s32.totalorder %s11, 1
    %p154 = por %p152, %p153
    %p155 = scmp.ne.s32.totalorder %s147, %s150
    %p156 = scmp.eq.s32.totalorder %s11, 0
    %p157 = por %p155, %p156
    %p158 = scmp.ne.s32.totalorder %s147, %s150
    %p159 = scmp.eq.s32.totalorder %s16, 1
    %p160 = por %p158, %p159
    %p161 = scmp.ne.s32.totalorder %s150, %s151
    %p162 = scmp.eq.s32.totalorder %s16, 0
    %p163 = por %p161, %p162
    %p164 = scmp.ne.s32.totalorder %s150, %s151
    %p165 = scmp.eq.s32.totalorder %s17, 1
    %p166 = por %p164, %p165
    %p168 = scmp.ne.s32.totalorder %s151, %s167
    %p169 = scmp.eq.s32.totalorder %s17, 0
    %p170 = por %p168, %p169
    %p171 = scmp.le.s32.totalorder 1, %s11
    %p172 = scmp.lt.s32.totalorder %s11, 3
    %p173 = pnand %p171, %p172
    %p174 = pneg %p173
    // Predicated region
    $region9: #{csp_ffc_forward.1} parent=5 // pred_check
      _
    $region10: #{csp_ffc_forward.1} parent=5 // pred_check_branch
      %176 = sbr.rel (%p173) target = $region12
    $region11: #{csp_ffc_forward.1} parent=5 // pred_region
      %s177 = ssub.s32 %s11, 1
      // Predicated region
      $region13: #{csp_ffc_forward.1} parent=11 // pred_check
        %p178 = pneg %p72
      $region14: #{csp_ffc_forward.1} parent=11 // pred_check_branch
        %180 = sbr.rel (%p178) target = $region16
      $region15: #{csp_ffc_forward.1} parent=11 // pred_region
        _
      $region16: #{csp_ffc_forward.1} parent=11 // pred_fallthru
        _
      // Predicated region
      $region17: #{csp_ffc_forward.1} parent=11 // pred_check
        %p181 = pneg %p93
      $region18: #{csp_ffc_forward.1} parent=11 // pred_check_branch
        %183 = sbr.rel (%p181) target = $region20
      $region19: #{csp_ffc_forward.1} parent=11 // pred_region
        _
      $region20: #{csp_ffc_forward.1} parent=11 // pred_fallthru
        _
      // Predicated region
      $region21: #{csp_ffc_forward.1} parent=11 // pred_check
        %p184 = pneg %p114
      $region22: #{csp_ffc_forward.1} parent=11 // pred_check_branch
        %186 = sbr.rel (%p184) target = $region24
      $region23: #{csp_ffc_forward.1} parent=11 // pred_region
        _
      $region24: #{csp_ffc_forward.1} parent=11 // pred_fallthru
        _
      // Predicated region
      $region25: #{csp_ffc_forward.1} parent=11 // pred_check
        %p187 = pneg %p135
      $region26: #{csp_ffc_forward.1} parent=11 // pred_check_branch
        %189 = sbr.rel (%p187) target = $region28
      $region27: #{csp_ffc_forward.1} parent=11 // pred_region
        _
      $region28: #{csp_ffc_forward.1} parent=11 // pred_fallthru
        _
    $region12: #{csp_ffc_forward.1} parent=5 // pred_fallthru
      _
    %p190 = scmp.lt.s32.totalorder %s11, 2
    // Predicated region
    $region29: #{csp_ffc_forward.1} parent=5 // pred_check
      %p191 = pneg %p190
    $region30: #{csp_ffc_forward.1} parent=5 // pred_check_branch
      %193 = sbr.rel (%p191) target = $region32
    $region31: #{csp_ffc_forward.1} parent=5 // pred_region
      // Predicated region
      $region33: #{csp_ffc_forward.1} parent=31 // pred_check
        %p194 = pneg %p45
      $region34: #{csp_ffc_forward.1} parent=31 // pred_check_branch
        %196 = sbr.rel (%p194) target = $region36
      $region35: #{csp_ffc_forward.1} parent=31 // pred_region
        %s197 = smul.u32 2, %s19
        %p198 = scmp.lt.s32.totalorder %s18, 1
        %s199 = scalar_select %p198, %s18, 1
        %p200 = scmp.lt.s32.totalorder %s197, 1
        %s201 = scalar_select %p200, %s197, 1
        %s202 = smul.addr %s199, 2
        %s203 = sadd.s32 %s201, %s202
        %s204 = smul.addr %s203, 4
        %s205 = scalar_lea.vmem %s0, %s204
        %s206 = smul.u32 2, %s19
      $region36: #{csp_ffc_forward.1} parent=31 // pred_fallthru
        _
    $region32: #{csp_ffc_forward.1} parent=5 // pred_fallthru
      _
    %p207 = scmp.le.s32.totalorder 1, %s11
    %p208 = scmp.lt.s32.totalorder %s11, 3
    %p209 = pnand %p207, %p208
    %p210 = pneg %p209
    // Predicated region
    $region37: #{csp_ffc_forward.1} parent=5 // pred_check
      _
    $region38: #{csp_ffc_forward.1} parent=5 // pred_check_branch
      %212 = sbr.rel (%p209) target = $region40
    $region39: #{csp_ffc_forward.1} parent=5 // pred_region
      %s213 = ssub.s32 %s11, 1
      %s214 = smul.u32 2, %s21
      %p215 = scmp.lt.s32.totalorder %s20, 1
      %s216 = scalar_select %p215, %s20, 1
      %p217 = scmp.lt.s32.totalorder %s214, 1
      %s218 = scalar_select %p217, %s214, 1
      %s219 = smul.addr %s216, 2
      %s220 = sadd.s32 %s218, %s219
      %s221 = smul.addr %s220, 4
      %s222 = scalar_lea.vmem %s0, %s221
      %p223 = pneg %p51
      %p224 = pneg %p48
      %p225 = pneg %p72
      %p226 = pneg %p69
      %p227 = pneg %p93
      %p228 = pneg %p90
      %p229 = pneg %p114
      %p230 = pneg %p111
      %p231 = pneg %p135
      %p232 = pneg %p132
      %p233 = pneg %p163
      %p234 = pneg %p160
      %s235 = smul.u32 2, %s21
      %p236 = scmp.lt.s32.totalorder %s20, 1
      %s237 = scalar_select %p236, %s20, 1
      %p238 = scmp.lt.s32.totalorder %s235, 1
      %s239 = scalar_select %p238, %s235, 1
      %s240 = smul.addr %s237, 2
      %s241 = sadd.s32 %s239, %s240
      %s242 = smul.addr %s241, 8
      %s243 = scalar_lea.vmem %s5, %s242
      %s244 = smul.u32 2, %s21
      %p245 = scmp.lt.s32.totalorder %s20, 1
      %s246 = scalar_select %p245, %s20, 1
      %p247 = scmp.lt.s32.totalorder %s244, 1
      %s248 = scalar_select %p247, %s244, 1
      %s249 = smul.addr %s246, 2
      %s250 = sadd.s32 %s248, %s249
      %s251 = smul.addr %s250, 4
      %s252 = scalar_lea.vmem %s0, %s251
      %s253 = smul.u32 2, %s21
      %s254 = smul.u32 2, %s21
      %p255 = scmp.lt.s32.totalorder %s20, 1
      %s256 = scalar_select %p255, %s20, 1
      %p257 = scmp.lt.s32.totalorder %s254, 1
      %s258 = scalar_select %p257, %s254, 1
      %s259 = smul.addr %s256, 2
      %s260 = sadd.s32 %s258, %s259
      %s261 = smul.addr %s260, 8
      %s262 = scalar_lea.vmem %s5, %s261
      %s263 = smul.u32 2, %s21
      %v264 = vld [vmem:[%s252] sm:$0xff]
      %v265 = vld [vmem:[%s1] sm:$0xff]
      %v266 = vld [vmem:[%s2] sm:$0xff]
      %268 = vset.pattern.permute.xlu0 0
      %269 = vperm.xlu0 %268, %v266
      %v270 = vpop.permute.xlu0 %269
      %v273 = vcombine.high %v264, %v264
      %vm274 = vcmask 31744
      %v276 = vsel %vm274, %v265, 0
      %vm278 = vcmask 1043456
      %v279 = vsel %vm278, %v264, 0
      %v281 = vsel %vm278, %v273, 0
      %283 = vmatprep.subr.mxu0 0.0
      %284 = vmatpush1.msra.mxu0 0.0
      %285 = vmatprep.subr.mxu0 0.0
      %286 = vmatpush1.msra.mxu0 0.0
      %287 = vmatprep.subr.mxu0 0.0
      %288 = vmatpush1.msra.mxu0 0.0
      %289 = vmatprep.subr.mxu0 0.0
      %290 = vmatpush1.msra.mxu0 0.0
      %291 = vmatprep.subr.mxu0 0.0
      %292 = vmatpush1.msra.mxu0 0.0
      %293 = vmatprep.subr.mxu0 0.0
      %294 = vmatpush1.msra.mxu0 0.0
      %295 = vmatprep.subr.mxu0 0.0
      %296 = vmatpush1.msra.mxu0 0.0
      %297 = vmatprep.subr.mxu0 0.0
      %298 = vmatpush1.msra.mxu0 0.0
      %299 = vmatprep.subr.mxu0 0.0
      %300 = vmatpush1.msra.mxu0 0.0
      %301 = vmatprep.subr.mxu0 0.0
      %302 = vmatpush1.msra.mxu0 0.0
      %303 = vmatprep.subr.mxu0 0.0
      %304 = vmatpush1.msra.mxu0 0.0
      %305 = vmatprep.subr.mxu0 0.0
      %306 = vmatpush1.msra.mxu0 0.0
      %307 = vmatprep.subr.mxu0 0.0
      %308 = vmatpush1.msra.mxu0 0.0
      %309 = vmatprep.subr.mxu0 0.0
      %310 = vmatpush1.msra.mxu0 0.0
      %311 = vmatprep.subr.mxu0 0.0
      %312 = vmatpush1.msra.mxu0 0.0
      %313 = vmatprep.subr.mxu0 %v281
      %314 = vmatpush1.msra.mxu0 %v279
      %315 = vmatprep.subr.mxu0 0.0
      %316 = vmatpush2.msra.mxu0 0.0
      %317 = vmatprep.subr.mxu0 0.0
      %318 = vmatpush2.msra.mxu0 0.0
      %319 = vmatprep.subr.mxu0 0.0
      %320 = vmatpush2.msra.mxu0 0.0
      %321 = vmatprep.subr.mxu0 0.0
      %322 = vmatpush2.msra.mxu0 0.0
      %323 = vmatprep.subr.mxu0 0.0
      %324 = vmatpush2.msra.mxu0 0.0
      %325 = vmatprep.subr.mxu0 0.0
      %326 = vmatpush2.msra.mxu0 0.0
      %327 = vmatprep.subr.mxu0 0.0
      %328 = vmatpush2.msra.mxu0 0.0
      %329 = vmatprep.subr.mxu0 0.0
      %330 = vmatpush2.msra.mxu0 0.0
      %331 = vmatprep.subr.mxu0 0.0
      %332 = vmatpush2.msra.mxu0 0.0
      %333 = vmatprep.subr.mxu0 0.0
      %334 = vmatpush2.msra.mxu0 0.0
      %335 = vmatprep.subr.mxu0 0.0
      %336 = vmatpush2.msra.mxu0 0.0
      %337 = vmatprep.subr.mxu0 0.0
      %338 = vmatpush2.msra.mxu0 0.0
      %339 = vmatprep.subr.mxu0 0.0
      %340 = vmatpush2.msra.mxu0 0.0
      %341 = vmatprep.subr.mxu0 0.0
      %342 = vmatpush2.msra.mxu0 0.0
      %343 = vmatprep.subr.mxu0 0.0
      %344 = vmatpush2.msra.mxu0 0.0
      %345 = vmatprep.subr.mxu0 0.0
      %346 = vmatpush2.msra.mxu0 0.0
      %347 = vmatprep.mubr.f32.mxu0 0.0
      %348 = vmatmul.mubr.f32.gmra.mxu0 %v276
      %v349 = vpop.f32.mrf.mxu0
      %v350 = vadd.f32 %v270, %v349
      %v351 = vpop.f32.mrf.mxu0
      %v352 = vadd.f32 %v270, %v351
      %353 = vdwg.mxu0
      %v354 = vxor.u32 %v350, 2147483648
      %v355 = vxor.u32 %v352, 2147483648
      %v356 = vmul.f32 %v354, 1.442695
      %v357 = vpow.pop %v356
      %v358 = vmul.f32 %v355, 1.442695
      %v359 = vpow.pop %v358
      %v360 = vadd.f32 %v357, 1.0
      %v361 = vadd.f32 %v359, 1.0
      %v362 = vrcp.pop %v360
      %v363 = vmul.f32 1.0, %v362
      %v364 = vrcp.pop %v361
      %v365 = vmul.f32 1.0, %v364
      %v366 = vmul.f32 %v350, %v363
      %v367 = vmul.f32 %v352, %v365
      %v368 = vld [vmem:[%s3] sm:$0xff]
      %v369 = vld [vmem:[%s4] sm:$0xff]
      %371 = vset.pattern.permute.xlu0 0
      %372 = vperm.xlu0 %371, %v369
      %v373 = vpop.permute.xlu0 %372
      %vm375 = vcmask 64512
      %v377 = vsel %vm375, %v368, 0
      %379 = vmatprep.subr.mxu0 0.0
      %380 = vmatpush1.msra.mxu0 0.0
      %381 = vmatprep.subr.mxu0 0.0
      %382 = vmatpush1.msra.mxu0 0.0
      %383 = vmatprep.subr.mxu0 0.0
      %384 = vmatpush1.msra.mxu0 0.0
      %385 = vmatprep.subr.mxu0 0.0
      %386 = vmatpush1.msra.mxu0 0.0
      %387 = vmatprep.subr.mxu0 0.0
      %388 = vmatpush1.msra.mxu0 0.0
      %389 = vmatprep.subr.mxu0 0.0
      %390 = vmatpush1.msra.mxu0 0.0
      %391 = vmatprep.subr.mxu0 0.0
      %392 = vmatpush1.msra.mxu0 0.0
      %393 = vmatprep.subr.mxu0 0.0
      %394 = vmatpush1.msra.mxu0 0.0
      %395 = vmatprep.subr.mxu0 0.0
      %396 = vmatpush1.msra.mxu0 0.0
      %397 = vmatprep.subr.mxu0 0.0
      %398 = vmatpush1.msra.mxu0 0.0
      %399 = vmatprep.subr.mxu0 0.0
      %400 = vmatpush1.msra.mxu0 0.0
      %401 = vmatprep.subr.mxu0 0.0
      %402 = vmatpush1.msra.mxu0 0.0
      %403 = vmatprep.subr.mxu0 0.0
      %404 = vmatpush1.msra.mxu0 0.0
      %405 = vmatprep.subr.mxu0 0.0
      %406 = vmatpush1.msra.mxu0 0.0
      %407 = vmatprep.subr.mxu0 0.0
      %408 = vmatpush1.msra.mxu0 0.0
      %409 = vmatprep.subr.mxu0 %v367
      %410 = vmatpush1.msra.mxu0 %v366
      %411 = vmatprep.subr.mxu0 0.0
      %412 = vmatpush2.msra.mxu0 0.0
      %413 = vmatprep.subr.mxu0 0.0
      %414 = vmatpush2.msra.mxu0 0.0
      %415 = vmatprep.subr.mxu0 0.0
      %416 = vmatpush2.msra.mxu0 0.0
      %417 = vmatprep.subr.mxu0 0.0
      %418 = vmatpush2.msra.mxu0 0.0
      %419 = vmatprep.subr.mxu0 0.0
      %420 = vmatpush2.msra.mxu0 0.0
      %421 = vmatprep.subr.mxu0 0.0
      %422 = vmatpush2.msra.mxu0 0.0
      %423 = vmatprep.subr.mxu0 0.0
      %424 = vmatpush2.msra.mxu0 0.0
      %425 = vmatprep.subr.mxu0 0.0
      %426 = vmatpush2.msra.mxu0 0.0
      %427 = vmatprep.subr.mxu0 0.0
      %428 = vmatpush2.msra.mxu0 0.0
      %429 = vmatprep.subr.mxu0 0.0
      %430 = vmatpush2.msra.mxu0 0.0
      %431 = vmatprep.subr.mxu0 0.0
      %432 = vmatpush2.msra.mxu0 0.0
      %433 = vmatprep.subr.mxu0 0.0
      %434 = vmatpush2.msra.mxu0 0.0
      %435 = vmatprep.subr.mxu0 0.0
      %436 = vmatpush2.msra.mxu0 0.0
      %437 = vmatprep.subr.mxu0 0.0
      %438 = vmatpush2.msra.mxu0 0.0
      %439 = vmatprep.subr.mxu0 0.0
      %440 = vmatpush2.msra.mxu0 0.0
      %441 = vmatprep.subr.mxu0 0.0
      %442 = vmatpush2.msra.mxu0 0.0
      %443 = vmatprep.mubr.f32.mxu0 0.0
      %444 = vmatmul.mubr.f32.gmra.mxu0 %v377
      %v445 = vpop.f32.mrf.mxu0
      %v446 = vadd.f32 %v373, %v445
      %v447 = vpop.f32.mrf.mxu0
      %v448 = vadd.f32 %v373, %v447
      %449 = vdwg.mxu0
      %v450 = vxor.u32 %v446, 2147483648
      %v451 = vxor.u32 %v448, 2147483648
      %v452 = vmul.f32 %v450, 1.442695
      %v453 = vpow.pop %v452
      %v454 = vmul.f32 %v451, 1.442695
      %v455 = vpow.pop %v454
      %v456 = vadd.f32 %v453, 1.0
      %v457 = vadd.f32 %v455, 1.0
      %v458 = vrcp.pop %v456
      %v459 = vmul.f32 1.0, %v458
      %v460 = vrcp.pop %v457
      %v461 = vmul.f32 1.0, %v460
      %v462 = vmul.f32 %v446, %v459
      %v463 = vmul.f32 %v448, %v461
      %464 = vst [vmem:[%s262] sm:$0xff] %v462
      %465 = vst [vmem:[%s262 + $0x8] sm:$0xff] %v463
      %s466 = smul.u32 2, %s21
      %p467 = scmp.lt.s32.totalorder %s20, 1
      %s468 = scalar_select %p467, %s20, 1
      %p469 = scmp.lt.s32.totalorder %s466, 1
      %s470 = scalar_select %p469, %s466, 1
      %s471 = smul.addr %s468, 2
      %s472 = sadd.s32 %s470, %s471
      %s473 = smul.addr %s472, 8
      %s474 = scalar_lea.vmem %s5, %s473
      // Predicated region
      $region41: #{csp_ffc_forward.1} parent=39 // pred_check
        %p475 = pneg %p160
      $region42: #{csp_ffc_forward.1} parent=39 // pred_check_branch
        %477 = sbr.rel (%p475) target = $region44
      $region43: #{csp_ffc_forward.1} parent=39 // pred_region
        %s478 = smul.u32 2, %s21
      $region44: #{csp_ffc_forward.1} parent=39 // pred_fallthru
        _
    $region40: #{csp_ffc_forward.1} parent=5 // pred_fallthru
      _
    %p479 = scmp.le.s32.totalorder 2, %s11
    // Predicated region
    $region45: #{csp_ffc_forward.1} parent=5 // pred_check
      %p480 = pneg %p479
    $region46: #{csp_ffc_forward.1} parent=5 // pred_check_branch
      %482 = sbr.rel (%p480) target = $region48
    $region47: #{csp_ffc_forward.1} parent=5 // pred_region
      %s483 = ssub.s32 %s11, 2
      // Predicated region
      $region49: #{csp_ffc_forward.1} parent=47 // pred_check
        %p484 = pneg %p166
      $region50: #{csp_ffc_forward.1} parent=47 // pred_check_branch
        %486 = sbr.rel (%p484) target = $region52
      $region51: #{csp_ffc_forward.1} parent=47 // pred_region
        %s487 = smul.u32 2, %s23
        %p488 = scmp.lt.s32.totalorder %s22, 1
        %s489 = scalar_select %p488, %s22, 1
        %p490 = scmp.lt.s32.totalorder %s487, 1
        %s491 = scalar_select %p490, %s487, 1
        %s492 = smul.addr %s489, 2
        %s493 = sadd.s32 %s491, %s492
        %s494 = smul.addr %s493, 8
        %s495 = scalar_lea.vmem %s5, %s494
      $region52: #{csp_ffc_forward.1} parent=47 // pred_fallthru
        _
    $region48: #{csp_ffc_forward.1} parent=5 // pred_fallthru
      _
  $region6: #{csp_ffc_forward.1} parent=0 // loop_footer
    %s15 = sadd.s32 1, %s11
  $region7: #{csp_ffc_forward.1} parent=0 // loop_footer_branch
    %10 = sbr.rel target = $region3
  $region8: #{csp_ffc_forward.1} parent=0 // loop_exit
    _

</llo_original>
